<compile_context>
chip_gen: v6e
topology: v6e:2x2x1
jax: 0.10.0
libtpu: 0.0.40
codegen_flags: <defaults>
</compile_context>

<pallas_src>
import jax
import jax.numpy as jnp
from jax.experimental import pallas as pl
from jax.experimental.pallas import tpu as pltpu


def _bow_fused_kernel(bow_ref, emb_ref, w_ref, b_ref, o_ref):
    """Fused Embedding-gather + (AvgPool-folded) Linear + sigmoid.

    bow_ref: SMEM (L,)        int32 token ids (drive dynamic row slices)
    emb_ref: VMEM (V, C)      f32   strided table emb_table[:, ::L], C = D//L
    w_ref:   VMEM (N, L, C)   f32   linear weight, w_ref[n, r, c] = W[n, r*C + c]
    b_ref:   VMEM (N, 1)      f32   bias
    o_ref:   VMEM (N, 1)      f32   sigmoid(logits); wrapper reshapes to (1, N)
    """
    L = bow_ref.shape[0]
    V = emb_ref.shape[0]

    # nn.Embedding lookup + AvgPool(stride=L) pick, fused: one dynamic
    # sublane-start row slice per token from the (already column-strided)
    # VMEM-resident table, driven by scalar reads from SMEM (unrolled, L=8).
    rows = []
    for r in range(L):
        tok = bow_ref[r]
        tok = jnp.minimum(jnp.maximum(tok, 0), V - 1)      # clamp: VMEM OOB is unchecked
        rows.append(emb_ref[pl.ds(tok, 1), :])             # (1, C)
    # Sublane stack -> (L, C) = (8, 4): one f32 vreg, no lane-axis concat.
    picked = jnp.concatenate(rows, axis=0)

    # Linear on the VPU: broadcast the picked tile over the leading label axis
    # (layout-preserving), multiply against the reshaped weight, then two
    # last-axis reductions down to one logit per label.
    prod = w_ref[...] * picked[None, :, :]                 # (N, L, C)
    s = jnp.sum(prod, axis=-1)                             # (N, L)
    z = jnp.sum(s, axis=-1, keepdims=True) + b_ref[...]    # (N, 1)

    # Exact sigmoid in f32 (only num_labels lanes; approx reciprocal not worth it).
    o_ref[...] = (1.0 / (1.0 + jnp.exp(-z))).astype(o_ref.dtype)


def prepare_params(emb_table, w, b, seq_len):
    """One-time, input-independent parameter transforms (hoisted out of the
    per-call path).  Folds AvgPool1d(kernel=1, stride=L)'s pick of flat[j*L]
    into a strided column slice of the embedding table."""
    V, D = emb_table.shape
    num_labels = b.shape[0]
    # TODO(synk): general D % seq_len != 0 case needs a per-position (row, col)
    # gather pattern instead of the clean column-stride fold; not needed here.
    assert D % seq_len == 0, "fast path assumes embedding_dim % len(bow_vec) == 0"
    C = D // seq_len
    emb_strided = emb_table[:, ::seq_len]                   # (V, C)
    w3 = w.reshape(num_labels, seq_len, C)                  # (N, L, C)
    b2 = b.reshape(num_labels, 1)                           # (N, 1)
    return (emb_strided.astype(jnp.float32),
            w3.astype(jnp.float32),
            b2.astype(jnp.float32))


@jax.jit
def bow_classifier_forward(bow_vec, emb_strided, w3, b2):
    """Pallas port of BoWClassifier.forward (single sentence).

    bow_vec:     (L,) int token indices
    emb_strided: (V, D//L) f32           from prepare_params
    w3:          (num_labels, L, D//L) f32
    b2:          (num_labels, 1) f32
    returns:     (1, num_labels) f32
    """
    num_labels = w3.shape[0]
    out = pl.pallas_call(
        _bow_fused_kernel,
        out_shape=jax.ShapeDtypeStruct((num_labels, 1), jnp.float32),
        in_specs=[
            pl.BlockSpec(memory_space=pltpu.MemorySpace.SMEM),   # token ids -> SMEM scalars
            pl.BlockSpec(memory_space=pltpu.MemorySpace.VMEM),   # strided table (whole, resident)
            pl.BlockSpec(memory_space=pltpu.MemorySpace.VMEM),   # reshaped weight
            pl.BlockSpec(memory_space=pltpu.MemorySpace.VMEM),   # bias
        ],
        out_specs=pl.BlockSpec(memory_space=pltpu.MemorySpace.VMEM),
    )(bow_vec.astype(jnp.int32), emb_strided, w3, b2)
    # (N, 1) -> (1, N): contiguous data, a free reshape under the same jit.
    return out.reshape(1, num_labels)


if __name__ == "__main__":
    VOCAB_SIZE = 50
    EMBEDDING_DIM = 32
    NUM_LABELS = 4
    SEQ_LEN = 8  # len(bow_vec)

    key = jax.random.PRNGKey(0)
    k_emb, k_w, k_b, k_tok = jax.random.split(key, 4)

    # Deterministic synthetic parameters (shapes from the module __init__).
    emb_table = jax.random.normal(k_emb, (VOCAB_SIZE, EMBEDDING_DIM), dtype=jnp.float32)
    w = jax.random.normal(k_w, (NUM_LABELS, EMBEDDING_DIM), dtype=jnp.float32) * 0.1
    b = jax.random.normal(k_b, (NUM_LABELS,), dtype=jnp.float32) * 0.1
    bow_vec = jax.random.randint(k_tok, (SEQ_LEN,), 0, VOCAB_SIZE, dtype=jnp.int32)

    # One-time parameter prep (outside the per-call path), then the fused kernel.
    emb_strided, w3, b2 = prepare_params(emb_table, w, b, SEQ_LEN)
    out = jax.block_until_ready(bow_classifier_forward(bow_vec, emb_strided, w3, b2))

    # Pure-JAX reference of the same PyTorch semantics.
    flat = emb_table[bow_vec].reshape(-1)
    final_input = flat[::SEQ_LEN][None, :]
    ref = jax.nn.sigmoid(final_input @ w.T + b[None, :])

    assert out.shape == (1, NUM_LABELS), out.shape
    assert jnp.allclose(out, ref, atol=1e-5, rtol=1e-5), (out, ref)
    print("KERNEL_OK")
</pallas_src>

<mosaic_0001>
module attributes {stable_mosaic.version = 11 : i64} {
  func.func @_bow_fused_kernel(%arg0: memref<8xi32, #tpu.memory_space<smem>>, %arg1: memref<50x4xf32, #tpu.memory_space<vmem>>, %arg2: memref<4x8x4xf32, #tpu.memory_space<vmem>>, %arg3: memref<4x1xf32, #tpu.memory_space<vmem>>, %arg4: memref<4x1xf32, #tpu.memory_space<vmem>>) attributes {dimension_semantics = [], scalar_prefetch = 0 : i64, scratch_operands = 0 : i64, tpu.core_type = #tpu.core_type<tc>} {
    %c0 = arith.constant 0 : index
    %0 = memref.load %arg0[%c0] : memref<8xi32, #tpu.memory_space<smem>>
    %c0_i32 = arith.constant 0 : i32
    %1 = arith.maxsi %0, %c0_i32 : i32
    %c49_i32 = arith.constant 49 : i32
    %2 = arith.minsi %1, %c49_i32 : i32
    %3 = arith.index_cast %2 : i32 to index
    %c0_0 = arith.constant 0 : index
    %4 = vector.load %arg1[%3, %c0_0] : memref<50x4xf32, #tpu.memory_space<vmem>>, vector<1x4xf32>
    %c1 = arith.constant 1 : index
    %5 = memref.load %arg0[%c1] : memref<8xi32, #tpu.memory_space<smem>>
    %c0_i32_1 = arith.constant 0 : i32
    %6 = arith.maxsi %5, %c0_i32_1 : i32
    %c49_i32_2 = arith.constant 49 : i32
    %7 = arith.minsi %6, %c49_i32_2 : i32
    %8 = arith.index_cast %7 : i32 to index
    %c0_3 = arith.constant 0 : index
    %9 = vector.load %arg1[%8, %c0_3] : memref<50x4xf32, #tpu.memory_space<vmem>>, vector<1x4xf32>
    %c2 = arith.constant 2 : index
    %10 = memref.load %arg0[%c2] : memref<8xi32, #tpu.memory_space<smem>>
    %c0_i32_4 = arith.constant 0 : i32
    %11 = arith.maxsi %10, %c0_i32_4 : i32
    %c49_i32_5 = arith.constant 49 : i32
    %12 = arith.minsi %11, %c49_i32_5 : i32
    %13 = arith.index_cast %12 : i32 to index
    %c0_6 = arith.constant 0 : index
    %14 = vector.load %arg1[%13, %c0_6] : memref<50x4xf32, #tpu.memory_space<vmem>>, vector<1x4xf32>
    %c3 = arith.constant 3 : index
    %15 = memref.load %arg0[%c3] : memref<8xi32, #tpu.memory_space<smem>>
    %c0_i32_7 = arith.constant 0 : i32
    %16 = arith.maxsi %15, %c0_i32_7 : i32
    %c49_i32_8 = arith.constant 49 : i32
    %17 = arith.minsi %16, %c49_i32_8 : i32
    %18 = arith.index_cast %17 : i32 to index
    %c0_9 = arith.constant 0 : index
    %19 = vector.load %arg1[%18, %c0_9] : memref<50x4xf32, #tpu.memory_space<vmem>>, vector<1x4xf32>
    %c4 = arith.constant 4 : index
    %20 = memref.load %arg0[%c4] : memref<8xi32, #tpu.memory_space<smem>>
    %c0_i32_10 = arith.constant 0 : i32
    %21 = arith.maxsi %20, %c0_i32_10 : i32
    %c49_i32_11 = arith.constant 49 : i32
    %22 = arith.minsi %21, %c49_i32_11 : i32
    %23 = arith.index_cast %22 : i32 to index
    %c0_12 = arith.constant 0 : index
    %24 = vector.load %arg1[%23, %c0_12] : memref<50x4xf32, #tpu.memory_space<vmem>>, vector<1x4xf32>
    %c5 = arith.constant 5 : index
    %25 = memref.load %arg0[%c5] : memref<8xi32, #tpu.memory_space<smem>>
    %c0_i32_13 = arith.constant 0 : i32
    %26 = arith.maxsi %25, %c0_i32_13 : i32
    %c49_i32_14 = arith.constant 49 : i32
    %27 = arith.minsi %26, %c49_i32_14 : i32
    %28 = arith.index_cast %27 : i32 to index
    %c0_15 = arith.constant 0 : index
    %29 = vector.load %arg1[%28, %c0_15] : memref<50x4xf32, #tpu.memory_space<vmem>>, vector<1x4xf32>
    %c6 = arith.constant 6 : index
    %30 = memref.load %arg0[%c6] : memref<8xi32, #tpu.memory_space<smem>>
    %c0_i32_16 = arith.constant 0 : i32
    %31 = arith.maxsi %30, %c0_i32_16 : i32
    %c49_i32_17 = arith.constant 49 : i32
    %32 = arith.minsi %31, %c49_i32_17 : i32
    %33 = arith.index_cast %32 : i32 to index
    %c0_18 = arith.constant 0 : index
    %34 = vector.load %arg1[%33, %c0_18] : memref<50x4xf32, #tpu.memory_space<vmem>>, vector<1x4xf32>
    %c7 = arith.constant 7 : index
    %35 = memref.load %arg0[%c7] : memref<8xi32, #tpu.memory_space<smem>>
    %c0_i32_19 = arith.constant 0 : i32
    %36 = arith.maxsi %35, %c0_i32_19 : i32
    %c49_i32_20 = arith.constant 49 : i32
    %37 = arith.minsi %36, %c49_i32_20 : i32
    %38 = arith.index_cast %37 : i32 to index
    %c0_21 = arith.constant 0 : index
    %39 = vector.load %arg1[%38, %c0_21] : memref<50x4xf32, #tpu.memory_space<vmem>>, vector<1x4xf32>
    %40 = tpu.concatenate %4, %9, %14, %19, %24, %29, %34, %39 in 0 : vector<1x4xf32>, vector<1x4xf32>, vector<1x4xf32>, vector<1x4xf32>, vector<1x4xf32>, vector<1x4xf32>, vector<1x4xf32>, vector<1x4xf32> -> vector<8x4xf32>
    %c0_22 = arith.constant 0 : index
    %c0_23 = arith.constant 0 : index
    %c0_24 = arith.constant 0 : index
    %41 = vector.load %arg2[%c0_22, %c0_23, %c0_24] : memref<4x8x4xf32, #tpu.memory_space<vmem>>, vector<4x8x4xf32>
    %42 = vector.shape_cast %40 : vector<8x4xf32> to vector<1x8x4xf32>
    %43 = vector.broadcast %42 : vector<1x8x4xf32> to vector<4x8x4xf32>
    %44 = arith.mulf %41, %43 : vector<4x8x4xf32>
    %cst = arith.constant dense<0.000000e+00> : vector<4x8xf32>
    %45 = vector.multi_reduction <add>, %44, %cst [2] : vector<4x8x4xf32> to vector<4x8xf32>
    %cst_25 = arith.constant dense<0.000000e+00> : vector<4xf32>
    %46 = vector.multi_reduction <add>, %45, %cst_25 [1] : vector<4x8xf32> to vector<4xf32>
    %47 = vector.shape_cast %46 : vector<4xf32> to vector<4x1xf32>
    %c0_26 = arith.constant 0 : index
    %c0_27 = arith.constant 0 : index
    %48 = vector.load %arg3[%c0_26, %c0_27] : memref<4x1xf32, #tpu.memory_space<vmem>>, vector<4x1xf32>
    %49 = arith.addf %47, %48 : vector<4x1xf32>
    %cst_28 = arith.constant 0.000000e+00 : f32
    %50 = vector.broadcast %cst_28 : f32 to vector<4x1xf32>
    %51 = arith.subf %50, %49 : vector<4x1xf32>
    %52 = math.exp %51 : vector<4x1xf32>
    %cst_29 = arith.constant 1.000000e+00 : f32
    %53 = vector.broadcast %cst_29 : f32 to vector<4x1xf32>
    %54 = arith.addf %53, %52 : vector<4x1xf32>
    %cst_30 = arith.constant 1.000000e+00 : f32
    %55 = vector.broadcast %cst_30 : f32 to vector<4x1xf32>
    %56 = arith.divf %55, %54 : vector<4x1xf32>
    %c0_31 = arith.constant 0 : index
    %c0_32 = arith.constant 0 : index
    %57 = vector.load %arg4[%c0_31, %c0_32] : memref<4x1xf32, #tpu.memory_space<vmem>>, vector<4x1xf32>
    tpu.vector_store %arg4[%c0_31, %c0_32], %56 {strides = array<i32>} : memref<4x1xf32, #tpu.memory_space<vmem>>, vector<4x1xf32>,
    return
  }
}

</mosaic_0001>

<llo_original>
// kernel: bow_classifier_forward.1
$region0: #{bow_classifier_forward.1}
  #allocation0 [shape = 'u32[]', space=smem, size = 0x4, offset = 0x4, fixed_abs, tag = 'smem constant byte address 0x4 - core index']
  #allocation1 [shape = 'u32[144,128]{1,0:T(1,128)}', space=vmem, size = 0x12000, scoped, tag = 'internal scratch']
  %s0 = inlined_call_operand.vmem [shape: s32[8], index: 0, kind: input, shape index: {}]
  %s1 = inlined_call_operand.vmem [shape: f32[50,4], index: 1, kind: input, shape index: {}]
  %s2 = inlined_call_operand.vmem [shape: f32[4,8,4], index: 2, kind: input, shape index: {}]
  %s3 = inlined_call_operand.vmem [shape: f32[4,1], index: 3, kind: input, shape index: {}]
  %s4 = inlined_call_operand.vmem [shape: f32[4,1], index: 4, kind: output, shape index: {}]
  %s5 = sld [smem:[#allocation0]]
  $region30: #{bow_classifier_forward.1} parent=0
    _
  %s7 = ssub.s32 1, %s5
  %s8 = scalar_select 0, %s7, %s5
  $region1: #{bow_classifier_forward.1} parent=0
    #allocation2 [shape = 'u8[512]{0}', space=smem, size = 0x200, scoped, tag = 'input window, operand 0, single buffered']
    #allocation3 [shape = 's32[1]{0}', space=sflag, size = 0x4, scoped, tag = 'scoped memory for bow_classifier_forward.1']
    %9 = vsyncpa [#allocation3], 0
    // Predicated region
    $region2: #{bow_classifier_forward.1} parent=1 // pred_check
      _
    $region3: #{bow_classifier_forward.1} parent=1 // pred_check_branch
      %11 = sbr.rel (0) target = $region5
    $region4: #{bow_classifier_forward.1} parent=1 // pred_region
      %s13 = ssub.s32 16, 16
      %14 = vsyncadd [#allocation3], %s13
      %s16 = sshll.u32 %s0, 4
      %s17 = int_to_ptr.vmem [resolvable:$true] %s16
      %19 = dma.vmem_to_smem %s17, 16, [#allocation2], [#allocation3]
    $region5: #{bow_classifier_forward.1} parent=1 // pred_fallthru
      _
    // Predicated region
    $region6: #{bow_classifier_forward.1} parent=1 // pred_check
      _
    $region7: #{bow_classifier_forward.1} parent=1 // pred_check_branch
      %21 = sbr.rel (0) target = $region9
    $region8: #{bow_classifier_forward.1} parent=1 // pred_region
      _
    $region9: #{bow_classifier_forward.1} parent=1 // pred_fallthru
      _
    // Predicated region
    $region10: #{bow_classifier_forward.1} parent=1 // pred_check
      _
    $region11: #{bow_classifier_forward.1} parent=1 // pred_check_branch
      %23 = sbr.rel (0) target = $region13
    $region12: #{bow_classifier_forward.1} parent=1 // pred_region
      _
    $region13: #{bow_classifier_forward.1} parent=1 // pred_fallthru
      _
    // Predicated region
    $region14: #{bow_classifier_forward.1} parent=1 // pred_check
      _
    $region15: #{bow_classifier_forward.1} parent=1 // pred_check_branch
      %25 = sbr.rel (0) target = $region17
    $region16: #{bow_classifier_forward.1} parent=1 // pred_region
      _
    $region17: #{bow_classifier_forward.1} parent=1 // pred_fallthru
      _
    // Predicated region
    $region18: #{bow_classifier_forward.1} parent=1 // pred_check
      _
    $region19: #{bow_classifier_forward.1} parent=1 // pred_check_branch
      %27 = sbr.rel (0) target = $region21
    $region20: #{bow_classifier_forward.1} parent=1 // pred_region
      %28 = dma.done [#allocation3], 16
    $region21: #{bow_classifier_forward.1} parent=1 // pred_fallthru
      _
    %29 = sfence
    %s30 = sld [smem:[#allocation2]]
    %p31 = scmp.gt.s32.totalorder %s30, 0
    %s32 = scalar_select %p31, %s30, 0
    %p33 = scmp.lt.s32.totalorder %s32, 49
    %s34 = scalar_select %p33, %s32, 49
    %s35 = scalar_lea.vmem %s1, %s34
    %v36 = vld [vmem:[%s35] sm:$0x1]
    %s37 = sld [smem:[#allocation2 + $0x1]]
    %p38 = scmp.gt.s32.totalorder %s37, 0
    %s39 = scalar_select %p38, %s37, 0
    %p40 = scmp.lt.s32.totalorder %s39, 49
    %s41 = scalar_select %p40, %s39, 49
    %s42 = scalar_lea.vmem %s1, %s41
    %v43 = vld [vmem:[%s42] sm:$0x1]
    %s44 = sld [smem:[#allocation2 + $0x2]]
    %p45 = scmp.gt.s32.totalorder %s44, 0
    %s46 = scalar_select %p45, %s44, 0
    %p47 = scmp.lt.s32.totalorder %s46, 49
    %s48 = scalar_select %p47, %s46, 49
    %s49 = scalar_lea.vmem %s1, %s48
    %v50 = vld [vmem:[%s49] sm:$0x1]
    %s51 = sld [smem:[#allocation2 + $0x3]]
    %p52 = scmp.gt.s32.totalorder %s51, 0
    %s53 = scalar_select %p52, %s51, 0
    %p54 = scmp.lt.s32.totalorder %s53, 49
    %s55 = scalar_select %p54, %s53, 49
    %s56 = scalar_lea.vmem %s1, %s55
    %v57 = vld [vmem:[%s56] sm:$0x1]
    %s58 = sld [smem:[#allocation2 + $0x4]]
    %p59 = scmp.gt.s32.totalorder %s58, 0
    %s60 = scalar_select %p59, %s58, 0
    %p61 = scmp.lt.s32.totalorder %s60, 49
    %s62 = scalar_select %p61, %s60, 49
    %s63 = scalar_lea.vmem %s1, %s62
    %v64 = vld [vmem:[%s63] sm:$0x1]
    %s65 = sld [smem:[#allocation2 + $0x5]]
    %p66 = scmp.gt.s32.totalorder %s65, 0
    %s67 = scalar_select %p66, %s65, 0
    %p68 = scmp.lt.s32.totalorder %s67, 49
    %s69 = scalar_select %p68, %s67, 49
    %s70 = scalar_lea.vmem %s1, %s69
    %v71 = vld [vmem:[%s70] sm:$0x1]
    %s72 = sld [smem:[#allocation2 + $0x6]]
    %p73 = scmp.gt.s32.totalorder %s72, 0
    %s74 = scalar_select %p73, %s72, 0
    %p75 = scmp.lt.s32.totalorder %s74, 49
    %s76 = scalar_select %p75, %s74, 49
    %s77 = scalar_lea.vmem %s1, %s76
    %v78 = vld [vmem:[%s77] sm:$0x1]
    %s79 = sld [smem:[#allocation2 + $0x7]]
    %p80 = scmp.gt.s32.totalorder %s79, 0
    %s81 = scalar_select %p80, %s79, 0
    %p82 = scmp.lt.s32.totalorder %s81, 49
    %s83 = scalar_select %p82, %s81, 49
    %s84 = scalar_lea.vmem %s1, %s83
    %v85 = vld [vmem:[%s84] sm:$0x1]
    %v87 = vrot.slane %v43, 7
    %v90 = vrot.slane %v50, 6
    %v93 = vrot.slane %v57, 5
    %v96 = vrot.slane %v64, 4
    %v99 = vrot.slane %v71, 3
    %v102 = vrot.slane %v78, 2
    %v105 = vrot.slane %v85, 1
    %vm107 = vcmask 1040384
    %v108 = vsel %vm107, %v36, %v87
    %vm109 = vcmask 1041408
    %v110 = vsel %vm109, %v108, %v90
    %vm111 = vcmask 1042432
    %v112 = vsel %vm111, %v110, %v93
    %vm113 = vcmask 1043456
    %v114 = vsel %vm113, %v112, %v96
    %vm115 = vcmask 1044480
    %v116 = vsel %vm115, %v114, %v99
    %vm117 = vcmask 1045504
    %v118 = vsel %vm117, %v116, %v102
    %vm119 = vcmask 1046528
    %v120 = vsel %vm119, %v118, %v105
    %v121 = vld [vmem:[%s2] sm:$0xff]
    %v122 = vld [vmem:[%s2 + $0x8] sm:$0xff]
    %v123 = vld [vmem:[%s2 + $0x10] sm:$0xff]
    %v124 = vld [vmem:[%s2 + $0x18] sm:$0xff]
    %v125 = vmul.f32 %v121, %v120
    %v126 = vmul.f32 %v122, %v120
    %v127 = vmul.f32 %v123, %v120
    %v128 = vmul.f32 %v124, %v120
    %vm129 = vcmask 31744
    %v130 = vsel %vm129, %v125, 0.0
    %131 = vadd.xlane.f32.xlu0 %v130
    %v132 = vpop.xlane.xlu0 %131
    %v133 = vsel %vm129, %v126, 0.0
    %134 = vadd.xlane.f32.xlu0 %v133
    %v135 = vpop.xlane.xlu0 %134
    %v136 = vsel %vm129, %v127, 0.0
    %137 = vadd.xlane.f32.xlu0 %v136
    %v138 = vpop.xlane.xlu0 %137
    %v139 = vsel %vm129, %v128, 0.0
    %140 = vadd.xlane.f32.xlu0 %v139
    %v141 = vpop.xlane.xlu0 %140
    %v146 = vlaneseq
    %v147 = vand.u32 %v146, 127
    %v148 = vlaneseq
    %v149 = vshrl.u32 %v148, 7
    %v150 = vsub.s32 %v147, %v149
    %v151 = vrot.slane %v132, %v150
    %v152 = vlaneseq
    %v153 = vshrl.u32 %v152, 7
    %v154 = vsub.s32 %v147, %v153
    %v155 = vrot.slane %v135, %v154
    %v156 = vlaneseq
    %v157 = vshrl.u32 %v156, 7
    %v158 = vsub.s32 %v147, %v157
    %v159 = vrot.slane %v138, %v158
    %v160 = vlaneseq
    %v161 = vshrl.u32 %v160, 7
    %v162 = vsub.s32 %v147, %v161
    %v163 = vrot.slane %v141, %v162
    %vm164 = vcmask 1041409
    %v165 = vsel %vm164, %v155, %v151
    %vm166 = vcmask 1042434
    %v167 = vsel %vm166, %v159, %v165
    %vm168 = vcmask 1043459
    %v169 = vsel %vm168, %v163, %v167
    %vm171 = vcmask 60416
    %v172 = vsel %vm171, %v169, 0.0
    %173 = vadd.xlane.f32.xlu0 %v172
    %v174 = vpop.xlane.xlu0 %173
    %v175 = vld [vmem:[%s3] sm:$0xf]
    %v176 = vadd.f32 %v174, %v175
    %v177 = vsub.f32 0.0, %v176
    %v178 = vmul.f32 %v177, 1.442695
    %v179 = vpow.pop %v178
    %v180 = vadd.f32 %v179, 1.0
    %v181 = vrcp.pop %v180
    %v182 = vmul.f32 1.0, %v181
    %vm183 = vcmask 3072
    %184 = vst.msk [vmem:[%s4] sm:$0xf] %vm183, %v182
    // Predicated region
    $region22: #{bow_classifier_forward.1} parent=1 // pred_check
      _
    $region23: #{bow_classifier_forward.1} parent=1 // pred_check_branch
      %186 = sbr.rel (0) target = $region25
    $region24: #{bow_classifier_forward.1} parent=1 // pred_region
      _
    $region25: #{bow_classifier_forward.1} parent=1 // pred_fallthru
      _
    // Predicated region
    $region26: #{bow_classifier_forward.1} parent=1 // pred_check
      _
    $region27: #{bow_classifier_forward.1} parent=1 // pred_check_branch
      %188 = sbr.rel (0) target = $region29
    $region28: #{bow_classifier_forward.1} parent=1 // pred_region
      _
    $region29: #{bow_classifier_forward.1} parent=1 // pred_fallthru
      _
    %189 = vsyncpa [#allocation3], 1

</llo_original>
